<compile_context>
chip_gen: v7x
topology: tpu7x:2x2x1
jax: 0.10.0
libtpu: 0.0.40
codegen_flags: <defaults>
</compile_context>

<pallas_src>
import jax
import jax.numpy as jnp
from jax.experimental import pallas as pl
from jax.experimental.pallas import tpu as pltpu


# ----- model configuration (representative small backbone/neck/decoder) -----
PATCH = 4
IN_CH = 3
EMBED_DIM = 32
NECK_DIM = 32
NUM_CLASSES = 8
FREEZE_ITERS = 100                    # backbone_module.freeze_iters

# lane-dense padded sizes: everything on the lane / MXU-column axis -> 128
LANE = 128
PATCH_DIM = IN_CH * PATCH * PATCH     # 48
K_PAD = LANE
EMBED_PAD = LANE
NECK_PAD = LANE
OUT_PAD = LANE


# ---------------------------------------------------------------------------
# Fused kernel: backbone -> neck -> mean-pool -> decoder head
# ---------------------------------------------------------------------------
def _fused_aio_kernel(patches_ref, bw_ref, bb_ref, nw_ref, nb_ref,
                      pool_ref, dw_ref, db_ref, o_ref):
    """All intermediates live in VMEM/vregs; only [B, OUT_PAD] logits stored.

    bf16 MXU operands, f32 accumulation, f32 elementwise/activation math.
    """
    # backbone: patch-embedding conv (stride == kernel == PATCH) as matmul
    x = jnp.dot(patches_ref[...], bw_ref[...],
                preferred_element_type=jnp.float32)
    # NOTE: tanh-approx GELU; PyTorch nn.GELU defaults to the exact erf form.
    # The synthetic backbone uses the tanh form for guaranteed Mosaic lowering.
    x = jax.nn.gelu(x + bb_ref[...], approximate=True)

    # neck: linear + ReLU
    y = jnp.dot(x.astype(jnp.bfloat16), nw_ref[...],
                preferred_element_type=jnp.float32)
    y = jnp.maximum(y + nb_ref[...], 0.0)

    # decoder, stage 1: per-image token mean-pool expressed as a tiny matmul
    # (pool_ref[b, m] = 1/N if token m belongs to image b else 0) -> rides the
    # MXU, no in-kernel reshape / cross-lane reduce needed.
    pooled = jnp.dot(pool_ref[...], y.astype(jnp.bfloat16),
                     preferred_element_type=jnp.float32)

    # decoder, stage 2: classification head (lane-dense 128-wide output)
    logits = jnp.dot(pooled.astype(jnp.bfloat16), dw_ref[...],
                     preferred_element_type=jnp.float32)
    o_ref[...] = (logits + db_ref[...]).astype(o_ref.dtype)


def fused_aio_forward(patches_pad, pool, params):
    B = pool.shape[0]
    vmem = pl.BlockSpec(memory_space=pltpu.MemorySpace.VMEM)
    return pl.pallas_call(
        _fused_aio_kernel,
        out_shape=jax.ShapeDtypeStruct((B, OUT_PAD), jnp.float32),
        in_specs=[vmem] * 8,
        out_specs=vmem,
    )(patches_pad,
      params["backbone_w"], params["backbone_b"],
      params["neck_w"], params["neck_b"],
      pool,
      params["dec_w"], params["dec_b"])


# ---------------------------------------------------------------------------
# Parameters (deterministic, padded once on host to lane-dense shapes)
# ---------------------------------------------------------------------------
def _pad_weight(w, rows, cols, dtype=jnp.bfloat16):
    out = jnp.zeros((rows, cols), dtype)
    return out.at[: w.shape[0], : w.shape[1]].set(w.astype(dtype))


def _pad_bias(b, cols):
    out = jnp.zeros((1, cols), jnp.float32)
    return out.at[0, : b.shape[0]].set(b.astype(jnp.float32))


def init_params(key):
    k1, k2, k3, k4, k5, k6 = jax.random.split(key, 6)
    bw = jax.random.normal(k1, (PATCH_DIM, EMBED_DIM), jnp.float32) * 0.02
    bb = jax.random.normal(k2, (EMBED_DIM,), jnp.float32) * 0.02
    nw = jax.random.normal(k3, (EMBED_DIM, NECK_DIM), jnp.float32) * 0.02
    nb = jax.random.normal(k4, (NECK_DIM,), jnp.float32) * 0.02
    dw = jax.random.normal(k5, (NECK_DIM, NUM_CLASSES), jnp.float32) * 0.02
    db = jax.random.normal(k6, (NUM_CLASSES,), jnp.float32) * 0.02
    # zero-pad to 128-lane shapes once; bf16 MXU weights, f32 biases
    # (biases are added after the f32 accumulate inside the kernel).
    return {
        "backbone_w": _pad_weight(bw, K_PAD, EMBED_PAD),
        "backbone_b": _pad_bias(bb, EMBED_PAD),
        "neck_w": _pad_weight(nw, EMBED_PAD, NECK_PAD),
        "neck_b": _pad_bias(nb, NECK_PAD),
        "dec_w": _pad_weight(dw, NECK_PAD, OUT_PAD),
        "dec_b": _pad_bias(db, OUT_PAD),
    }


# ---------------------------------------------------------------------------
# Glue: NCHW -> flattened patches (plain JAX layout plumbing)
# ---------------------------------------------------------------------------
def _extract_patches(x_nchw):
    """NCHW -> [B * num_patches, C * PATCH * PATCH] (row-major patch order)."""
    B, C, H, W = x_nchw.shape
    hp, wp = H // PATCH, W // PATCH
    x = x_nchw.reshape(B, C, hp, PATCH, wp, PATCH)
    x = jnp.transpose(x, (0, 2, 4, 1, 3, 5))          # [B, hp, wp, C, p, p]
    return x.reshape(B * hp * wp, C * PATCH * PATCH), B, hp * wp


# ---------------------------------------------------------------------------
# aio_entry.forward (task != 'ssl' path)
# ---------------------------------------------------------------------------
def aio_entry_forward(params, input_var, current_step):
    patches, B, n_tok = _extract_patches(input_var)
    M = patches.shape[0]

    # zero-pad flattened-patch features to the 128-lane boundary; bf16 operand
    patches_pad = jnp.zeros((M, K_PAD), jnp.bfloat16).at[:, :PATCH_DIM].set(
        patches.astype(jnp.bfloat16))

    # per-image mean-pool matrix (1/N on the block diagonal; 1/16 exact in bf16)
    tok_owner = jnp.arange(M) // n_tok
    pool = (tok_owner[None, :] == jnp.arange(B)[:, None]).astype(jnp.float32)
    pool = (pool / n_tok).astype(jnp.bfloat16)

    # freeze_iters / torch.no_grad only gates gradients; the forward value is
    # identical, so the fused forward drops the branch entirely.
    # TODO(synk): for training parity, un-fuse the backbone matmul (or wrap it
    # in a custom_vjp) to stop gradients when current_step < FREEZE_ITERS.
    del current_step

    logits_pad = fused_aio_forward(patches_pad, pool, params)
    return logits_pad[:, :NUM_CLASSES]
    # TODO(synk): ssl branch (momentum EMA parameter update + dual-view split)
    # is a parameter-update side effect with no single-kernel equivalent.


if __name__ == "__main__":
    key = jax.random.PRNGKey(0)
    pkey, xkey = jax.random.split(key)
    params = init_params(pkey)

    # input_var ~ image batch, NCHW as the PyTorch module expects
    x = jax.random.normal(xkey, (2, IN_CH, 16, 16), jnp.float32)

    out = aio_entry_forward(params, x, current_step=10)
    out = jax.block_until_ready(out)
    assert out.shape == (2, NUM_CLASSES)
    assert bool(jnp.all(jnp.isfinite(out)))
    print("KERNEL_OK")
</pallas_src>

<mosaic_0001>
module attributes {stable_mosaic.version = 11 : i64} {
  func.func @_fused_aio_kernel(%arg0: memref<32x128xbf16, #tpu.memory_space<vmem>>, %arg1: memref<128x128xbf16, #tpu.memory_space<vmem>>, %arg2: memref<1x128xf32, #tpu.memory_space<vmem>>, %arg3: memref<128x128xbf16, #tpu.memory_space<vmem>>, %arg4: memref<1x128xf32, #tpu.memory_space<vmem>>, %arg5: memref<2x32xbf16, #tpu.memory_space<vmem>>, %arg6: memref<128x128xbf16, #tpu.memory_space<vmem>>, %arg7: memref<1x128xf32, #tpu.memory_space<vmem>>, %arg8: memref<2x128xf32, #tpu.memory_space<vmem>>) attributes {dimension_semantics = [], scalar_prefetch = 0 : i64, scratch_operands = 0 : i64, tpu.core_type = #tpu.core_type<tc>} {
    %c0 = arith.constant 0 : index
    %c0_0 = arith.constant 0 : index
    %0 = vector.load %arg0[%c0, %c0_0] : memref<32x128xbf16, #tpu.memory_space<vmem>>, vector<32x128xbf16>
    %c0_1 = arith.constant 0 : index
    %c0_2 = arith.constant 0 : index
    %1 = vector.load %arg1[%c0_1, %c0_2] : memref<128x128xbf16, #tpu.memory_space<vmem>>, vector<128x128xbf16>
    %cst = arith.constant dense<0.000000e+00> : vector<32x128xf32>
    %2 = tpu.matmul %0, %1, %cst {dimension_numbers = #tpu.dot_dimension_numbers<[1], [0], [0], [1], [0, 0, 1, 1], [], []>} : vector<32x128xbf16>, vector<128x128xbf16>, vector<32x128xf32> -> vector<32x128xf32>
    %c0_3 = arith.constant 0 : index
    %c0_4 = arith.constant 0 : index
    %3 = vector.load %arg2[%c0_3, %c0_4] : memref<1x128xf32, #tpu.memory_space<vmem>>, vector<1x128xf32>
    %4 = vector.broadcast %3 : vector<1x128xf32> to vector<32x128xf32>
    %5 = arith.addf %2, %4 : vector<32x128xf32>
    %6 = arith.mulf %5, %5 : vector<32x128xf32>
    %7 = arith.mulf %5, %6 : vector<32x128xf32>
    %cst_5 = arith.constant 4.471500e-02 : f32
    %8 = vector.broadcast %cst_5 : f32 to vector<32x128xf32>
    %9 = arith.mulf %8, %7 : vector<32x128xf32>
    %10 = arith.addf %5, %9 : vector<32x128xf32>
    %cst_6 = arith.constant 0.797884583 : f32
    %11 = vector.broadcast %cst_6 : f32 to vector<32x128xf32>
    %12 = arith.mulf %11, %10 : vector<32x128xf32>
    %13 = math.tanh %12 : vector<32x128xf32>
    %cst_7 = arith.constant 1.000000e+00 : f32
    %14 = vector.broadcast %cst_7 : f32 to vector<32x128xf32>
    %15 = arith.addf %14, %13 : vector<32x128xf32>
    %cst_8 = arith.constant 5.000000e-01 : f32
    %16 = vector.broadcast %cst_8 : f32 to vector<32x128xf32>
    %17 = arith.mulf %16, %15 : vector<32x128xf32>
    %18 = arith.mulf %5, %17 : vector<32x128xf32>
    %19 = arith.truncf %18 : vector<32x128xf32> to vector<32x128xbf16>
    %c0_9 = arith.constant 0 : index
    %c0_10 = arith.constant 0 : index
    %20 = vector.load %arg3[%c0_9, %c0_10] : memref<128x128xbf16, #tpu.memory_space<vmem>>, vector<128x128xbf16>
    %cst_11 = arith.constant dense<0.000000e+00> : vector<32x128xf32>
    %21 = tpu.matmul %19, %20, %cst_11 {dimension_numbers = #tpu.dot_dimension_numbers<[1], [0], [0], [1], [0, 0, 1, 1], [], []>} : vector<32x128xbf16>, vector<128x128xbf16>, vector<32x128xf32> -> vector<32x128xf32>
    %c0_12 = arith.constant 0 : index
    %c0_13 = arith.constant 0 : index
    %22 = vector.load %arg4[%c0_12, %c0_13] : memref<1x128xf32, #tpu.memory_space<vmem>>, vector<1x128xf32>
    %23 = vector.broadcast %22 : vector<1x128xf32> to vector<32x128xf32>
    %24 = arith.addf %21, %23 : vector<32x128xf32>
    %cst_14 = arith.constant 0.000000e+00 : f32
    %25 = vector.broadcast %cst_14 : f32 to vector<32x128xf32>
    %26 = arith.maximumf %24, %25 : vector<32x128xf32>
    %c0_15 = arith.constant 0 : index
    %c0_16 = arith.constant 0 : index
    %27 = vector.load %arg5[%c0_15, %c0_16] : memref<2x32xbf16, #tpu.memory_space<vmem>>, vector<2x32xbf16>
    %28 = arith.truncf %26 : vector<32x128xf32> to vector<32x128xbf16>
    %cst_17 = arith.constant dense<0.000000e+00> : vector<2x128xf32>
    %29 = tpu.matmul %27, %28, %cst_17 {dimension_numbers = #tpu.dot_dimension_numbers<[1], [0], [0], [1], [0, 0, 1, 1], [], []>} : vector<2x32xbf16>, vector<32x128xbf16>, vector<2x128xf32> -> vector<2x128xf32>
    %30 = arith.truncf %29 : vector<2x128xf32> to vector<2x128xbf16>
    %c0_18 = arith.constant 0 : index
    %c0_19 = arith.constant 0 : index
    %31 = vector.load %arg6[%c0_18, %c0_19] : memref<128x128xbf16, #tpu.memory_space<vmem>>, vector<128x128xbf16>
    %cst_20 = arith.constant dense<0.000000e+00> : vector<2x128xf32>
    %32 = tpu.matmul %30, %31, %cst_20 {dimension_numbers = #tpu.dot_dimension_numbers<[1], [0], [0], [1], [0, 0, 1, 1], [], []>} : vector<2x128xbf16>, vector<128x128xbf16>, vector<2x128xf32> -> vector<2x128xf32>
    %c0_21 = arith.constant 0 : index
    %c0_22 = arith.constant 0 : index
    %33 = vector.load %arg7[%c0_21, %c0_22] : memref<1x128xf32, #tpu.memory_space<vmem>>, vector<1x128xf32>
    %34 = vector.broadcast %33 : vector<1x128xf32> to vector<2x128xf32>
    %35 = arith.addf %32, %34 : vector<2x128xf32>
    %c0_23 = arith.constant 0 : index
    %c0_24 = arith.constant 0 : index
    %36 = vector.load %arg8[%c0_23, %c0_24] : memref<2x128xf32, #tpu.memory_space<vmem>>, vector<2x128xf32>
    tpu.vector_store %arg8[%c0_23, %c0_24], %35 {strides = array<i32>} : memref<2x128xf32, #tpu.memory_space<vmem>>, vector<2x128xf32>,
    return
  }
}

</mosaic_0001>

<llo_original>
// kernel: tpu_custom_call.1
$region0: #{tpu_custom_call.1}
  #allocation0 [shape = 'u32[]', space=smem, size = 0x4, offset = 0x4, fixed_abs, tag = 'smem constant byte address 0x4 - core index']
  #allocation1 [shape = 'u32[144,128]{1,0:T(1,128)}', space=vmem, size = 0x12000, scoped, tag = 'internal scratch']
  %s0 = inlined_call_operand.hbm [shape: bf16[32,128], index: 0, kind: input, shape index: {}]
  %s1 = inlined_call_operand.hbm [shape: bf16[128,128], index: 1, kind: input, shape index: {}]
  %s2 = inlined_call_operand.vmem [shape: f32[1,128], index: 2, kind: input, shape index: {}]
  %s3 = inlined_call_operand.hbm [shape: bf16[128,128], index: 3, kind: input, shape index: {}]
  %s4 = inlined_call_operand.vmem [shape: f32[1,128], index: 4, kind: input, shape index: {}]
  %s5 = inlined_call_operand.vmem [shape: bf16[2,32], index: 5, kind: input, shape index: {}]
  %s6 = inlined_call_operand.hbm [shape: bf16[128,128], index: 6, kind: input, shape index: {}]
  %s7 = inlined_call_operand.vmem [shape: f32[1,128], index: 7, kind: input, shape index: {}]
  %s8 = inlined_call_operand.hbm [shape: f32[2,128], index: 8, kind: output, shape index: {}]
  %s9 = sld [smem:[#allocation0]]
  $region58: #{tpu_custom_call.1} parent=0
    _
  %s11 = ssub.s32 1, %s9
  %s12 = scalar_select 0, %s11, %s9
  $region1: #{tpu_custom_call.1} parent=0
    #allocation2 [shape = 'u8[8192]{0}', space=vmem, size = 0x2000, scoped, tag = 'input window, operand 0, single buffered']
    #allocation3 [shape = 's32[1]{0}', space=sflag, size = 0x4, scoped, tag = 'scoped memory for tpu_custom_call.1']
    #allocation4 [shape = 's32[1]{0}', space=sflag, size = 0x4, scoped, tag = 'scoped memory for tpu_custom_call.1']
    #allocation5 [shape = 'u8[32768]{0}', space=vmem, size = 0x8000, scoped, tag = 'input window, operand 1, single buffered']
    #allocation6 [shape = 's32[1]{0}', space=sflag, size = 0x4, scoped, tag = 'scoped memory for tpu_custom_call.1']
    #allocation7 [shape = 'u8[32768]{0}', space=vmem, size = 0x8000, scoped, tag = 'input window, operand 3, single buffered']
    #allocation8 [shape = 'u8[32768]{0}', space=vmem, size = 0x8000, scoped, tag = 'input window, operand 6, single buffered']
    #allocation9 [shape = 's32[1]{0}', space=sflag, size = 0x4, scoped, tag = 'scoped memory for tpu_custom_call.1']
    #allocation10 [shape = 'u8[1024]{0}', space=vmem, size = 0x400, scoped, tag = 'output window, operand 0, single buffered']
    %13 = vsyncpa [#allocation3], 0
    %14 = vsyncpa [#allocation6], 0
    %15 = vsyncpa [#allocation9], 0
    %16 = vsyncpa [#allocation4], 0
    // Predicated region
    $region2: #{tpu_custom_call.1} parent=1 // pred_check
      _
    $region3: #{tpu_custom_call.1} parent=1 // pred_check_branch
      %18 = sbr.rel (0) target = $region5
    $region4: #{tpu_custom_call.1} parent=1 // pred_region
      %s20 = ssub.s32 256, 256
      %21 = vsyncadd [#allocation3], %s20
      %s22 = sshll.u32 [#allocation2], 4
      %s23 = int_to_ptr.vmem [resolvable:$true] %s22
      %28 = dma.hbm_to_vmem [thread:$0]  %s0, 256, %s23, [#allocation3], 64, 64, 4
    $region5: #{tpu_custom_call.1} parent=1 // pred_fallthru
      _
    // Predicated region
    $region6: #{tpu_custom_call.1} parent=1 // pred_check
      _
    $region7: #{tpu_custom_call.1} parent=1 // pred_check_branch
      %30 = sbr.rel (0) target = $region9
    $region8: #{tpu_custom_call.1} parent=1 // pred_region
      %s32 = ssub.s32 1024, 1024
      %33 = vsyncadd [#allocation6], %s32
      %s34 = sshll.u32 [#allocation5], 4
      %s35 = int_to_ptr.vmem [resolvable:$true] %s34
      %40 = dma.hbm_to_vmem [thread:$0]  %s1, 1024, %s35, [#allocation6], 64, 64, 4
    $region9: #{tpu_custom_call.1} parent=1 // pred_fallthru
      _
    // Predicated region
    $region10: #{tpu_custom_call.1} parent=1 // pred_check
      _
    $region11: #{tpu_custom_call.1} parent=1 // pred_check_branch
      %42 = sbr.rel (0) target = $region13
    $region12: #{tpu_custom_call.1} parent=1 // pred_region
      _
    $region13: #{tpu_custom_call.1} parent=1 // pred_fallthru
      _
    // Predicated region
    $region14: #{tpu_custom_call.1} parent=1 // pred_check
      _
    $region15: #{tpu_custom_call.1} parent=1 // pred_check_branch
      %44 = sbr.rel (0) target = $region17
    $region16: #{tpu_custom_call.1} parent=1 // pred_region
      %s46 = ssub.s32 1024, 1024
      %47 = vsyncadd [#allocation6], %s46
      %s48 = sshll.u32 [#allocation7], 4
      %s49 = int_to_ptr.vmem [resolvable:$true] %s48
      %54 = dma.hbm_to_vmem [thread:$0]  %s3, 1024, %s49, [#allocation6], 64, 64, 4
    $region17: #{tpu_custom_call.1} parent=1 // pred_fallthru
      _
    // Predicated region
    $region18: #{tpu_custom_call.1} parent=1 // pred_check
      _
    $region19: #{tpu_custom_call.1} parent=1 // pred_check_branch
      %56 = sbr.rel (0) target = $region21
    $region20: #{tpu_custom_call.1} parent=1 // pred_region
      _
    $region21: #{tpu_custom_call.1} parent=1 // pred_fallthru
      _
    // Predicated region
    $region22: #{tpu_custom_call.1} parent=1 // pred_check
      _
    $region23: #{tpu_custom_call.1} parent=1 // pred_check_branch
      %58 = sbr.rel (0) target = $region25
    $region24: #{tpu_custom_call.1} parent=1 // pred_region
      _
    $region25: #{tpu_custom_call.1} parent=1 // pred_fallthru
      _
    // Predicated region
    $region26: #{tpu_custom_call.1} parent=1 // pred_check
      _
    $region27: #{tpu_custom_call.1} parent=1 // pred_check_branch
      %60 = sbr.rel (0) target = $region29
    $region28: #{tpu_custom_call.1} parent=1 // pred_region
      %s62 = ssub.s32 1024, 1024
      %63 = vsyncadd [#allocation9], %s62
      %s64 = sshll.u32 [#allocation8], 4
      %s65 = int_to_ptr.vmem [resolvable:$true] %s64
      %70 = dma.hbm_to_vmem [thread:$0]  %s6, 1024, %s65, [#allocation9], 64, 64, 4
    $region29: #{tpu_custom_call.1} parent=1 // pred_fallthru
      _
    // Predicated region
    $region30: #{tpu_custom_call.1} parent=1 // pred_check
      _
    $region31: #{tpu_custom_call.1} parent=1 // pred_check_branch
      %72 = sbr.rel (0) target = $region33
    $region32: #{tpu_custom_call.1} parent=1 // pred_region
      _
    $region33: #{tpu_custom_call.1} parent=1 // pred_fallthru
      _
    // Predicated region
    $region34: #{tpu_custom_call.1} parent=1 // pred_check
      _
    $region35: #{tpu_custom_call.1} parent=1 // pred_check_branch
      %74 = sbr.rel (0) target = $region37
    $region36: #{tpu_custom_call.1} parent=1 // pred_region
      %75 = dma.done [#allocation3], 256
    $region37: #{tpu_custom_call.1} parent=1 // pred_fallthru
      _
    // Predicated region
    $region38: #{tpu_custom_call.1} parent=1 // pred_check
      _
    $region39: #{tpu_custom_call.1} parent=1 // pred_check_branch
      %77 = sbr.rel (0) target = $region41
    $region40: #{tpu_custom_call.1} parent=1 // pred_region
      %78 = dma.done [#allocation6], 1024
    $region41: #{tpu_custom_call.1} parent=1 // pred_fallthru
      _
    // Predicated region
    $region42: #{tpu_custom_call.1} parent=1 // pred_check
      _
    $region43: #{tpu_custom_call.1} parent=1 // pred_check_branch
      %80 = sbr.rel (0) target = $region45
    $region44: #{tpu_custom_call.1} parent=1 // pred_region
      %81 = dma.done [#allocation6], 1024
    $region45: #{tpu_custom_call.1} parent=1 // pred_fallthru
      _
    // Predicated region
    $region46: #{tpu_custom_call.1} parent=1 // pred_check
      _
    $region47: #{tpu_custom_call.1} parent=1 // pred_check_branch
      %83 = sbr.rel (0) target = $region49
    $region48: #{tpu_custom_call.1} parent=1 // pred_region
      %84 = dma.done [#allocation9], 1024
    $region49: #{tpu_custom_call.1} parent=1 // pred_fallthru
      _
    %v86 = vld [vmem:[#allocation2] sm:$0xf]
    %v87 = vld [vmem:[#allocation2 + $0x4] sm:$0xf]
    %v88 = vld [vmem:[#allocation2 + $0x8] sm:$0xf]
    %v89 = vld [vmem:[#allocation2 + $0xc] sm:$0xf]
    %v90 = vld [vmem:[#allocation5] sm:$0xf]
    %v91 = vld [vmem:[#allocation5 + $0x4] sm:$0xf]
    %v92 = vld [vmem:[#allocation5 + $0x8] sm:$0xf]
    %v93 = vld [vmem:[#allocation5 + $0xc] sm:$0xf]
    %v94 = vld [vmem:[#allocation5 + $0x10] sm:$0xf]
    %v95 = vld [vmem:[#allocation5 + $0x14] sm:$0xf]
    %v96 = vld [vmem:[#allocation5 + $0x18] sm:$0xf]
    %v97 = vld [vmem:[#allocation5 + $0x1c] sm:$0xf]
    %v98 = vld [vmem:[#allocation5 + $0x20] sm:$0xf]
    %v99 = vld [vmem:[#allocation5 + $0x24] sm:$0xf]
    %v100 = vld [vmem:[#allocation5 + $0x28] sm:$0xf]
    %v101 = vld [vmem:[#allocation5 + $0x2c] sm:$0xf]
    %v102 = vld [vmem:[#allocation5 + $0x30] sm:$0xf]
    %v103 = vld [vmem:[#allocation5 + $0x34] sm:$0xf]
    %v104 = vld [vmem:[#allocation5 + $0x38] sm:$0xf]
    %v105 = vld [vmem:[#allocation5 + $0x3c] sm:$0xf]
    %v106 = vld [vmem:[%s2] sm:$0x1]
    %v108 = vlaneseq
    %v109 = vshrl.u32 %v108, 7
    %v110 = vsub.s32 0, %v109
    %v111 = vrot.slane %v106, %v110
    %v117 = vunpack.c.l.b16 %v86
    %v118 = vunpack.c.l.b16 %v87
    %v119 = vunpack.c.l.b16 %v88
    %v120 = vunpack.c.l.b16 %v89
    %v121 = vpack.c.b16 %v118, %v117
    %v122 = vpack.c.b16 %v120, %v119
    %v141 = vunpack.c.l.b16 %v90
    %v142 = vunpack.c.l.b16 %v91
    %v143 = vunpack.c.l.b16 %v92
    %v144 = vunpack.c.l.b16 %v93
    %v145 = vunpack.c.l.b16 %v94
    %v146 = vunpack.c.l.b16 %v95
    %v147 = vunpack.c.l.b16 %v96
    %v148 = vunpack.c.l.b16 %v97
    %v149 = vunpack.c.l.b16 %v98
    %v150 = vunpack.c.l.b16 %v99
    %v151 = vunpack.c.l.b16 %v100
    %v152 = vunpack.c.l.b16 %v101
    %v153 = vunpack.c.l.b16 %v102
    %v154 = vunpack.c.l.b16 %v103
    %v155 = vunpack.c.l.b16 %v104
    %v156 = vunpack.c.l.b16 %v105
    %v157 = vpack.c.b16 %v142, %v141
    %v158 = vpack.c.b16 %v144, %v143
    %v159 = vpack.c.b16 %v146, %v145
    %v160 = vpack.c.b16 %v148, %v147
    %v161 = vpack.c.b16 %v150, %v149
    %v162 = vpack.c.b16 %v152, %v151
    %v163 = vpack.c.b16 %v154, %v153
    %v164 = vpack.c.b16 %v156, %v155
    %173 = vmatprep.subr.bf16.mxu0 0
    %174 = vmatpush1.bf16.msra.mxu0 %v157
    %175 = vmatprep.subr.bf16.mxu0 0
    %176 = vmatpush1.bf16.msra.mxu0 %v158
    %177 = vmatprep.subr.bf16.mxu0 0
    %178 = vmatpush1.bf16.msra.mxu0 %v159
    %179 = vmatprep.subr.bf16.mxu0 0
    %180 = vmatpush1.bf16.msra.mxu0 %v160
    %181 = vmatprep.subr.bf16.mxu0 0
    %182 = vmatpush1.bf16.msra.mxu0 %v161
    %183 = vmatprep.subr.bf16.mxu0 0
    %184 = vmatpush1.bf16.msra.mxu0 %v162
    %185 = vmatprep.subr.bf16.mxu0 0
    %186 = vmatpush1.bf16.msra.mxu0 %v163
    %187 = vmatprep.subr.bf16.mxu0 0
    %188 = vmatpush1.bf16.msra.mxu0 %v164
    %189 = vmatprep.subr.bf16.mxu0 0
    %190 = vmatpush1.bf16.msra.mxu0 0
    %191 = vmatprep.subr.bf16.mxu0 0
    %192 = vmatpush1.bf16.msra.mxu0 0
    %193 = vmatprep.subr.bf16.mxu0 0
    %194 = vmatpush1.bf16.msra.mxu0 0
    %195 = vmatprep.subr.bf16.mxu0 0
    %196 = vmatpush1.bf16.msra.mxu0 0
    %197 = vmatprep.subr.bf16.mxu0 0
    %198 = vmatpush1.bf16.msra.mxu0 0
    %199 = vmatprep.subr.bf16.mxu0 0
    %200 = vmatpush1.bf16.msra.mxu0 0
    %201 = vmatprep.subr.bf16.mxu0 0
    %202 = vmatpush1.bf16.msra.mxu0 0
    %203 = vmatprep.subr.bf16.mxu0 0
    %204 = vmatpush1.bf16.msra.mxu0 0
    %205 = vmatprep.mubr.bf16.mxu0 0
    %206 = vmatmul.mubr.bf16.gmra.mrb[0].mxu0 %v121
    %v207 = vpop.f32.mrb[0].mxu0
    %v208 = vadd.f32 %v111, %v207
    %v209 = vpop.f32.mrb[0].mxu0
    %v210 = vpop.f32.mrb[0].mxu0
    %v211 = vadd.f32 %v111, %v210
    %v212 = vpop.f32.mrb[0].mxu0
    %213 = vmatprep.mubr.bf16.mxu0 0
    %214 = vmatmul.mubr.bf16.gmra.mrb[0].mxu0 %v122
    %v215 = vpop.f32.mrb[0].mxu0
    %v216 = vadd.f32 %v111, %v215
    %v217 = vpop.f32.mrb[0].mxu0
    %v218 = vpop.f32.mrb[0].mxu0
    %v219 = vadd.f32 %v111, %v218
    %v220 = vpop.f32.mrb[0].mxu0
    %221 = vdwg.mxu0
    %v222 = vmul.f32 %v208, %v208
    %v223 = vmul.f32 %v211, %v211
    %v224 = vmul.f32 %v216, %v216
    %v225 = vmul.f32 %v219, %v219
    %v226 = vmul.f32 %v208, %v222
    %v227 = vmul.f32 %v211, %v223
    %v228 = vmul.f32 %v216, %v224
    %v229 = vmul.f32 %v219, %v225
    %v230 = vmul.f32 %v226, 0.044715
    %v231 = vmul.f32 %v227, 0.044715
    %v232 = vmul.f32 %v228, 0.044715
    %v233 = vmul.f32 %v229, 0.044715
    %v234 = vadd.f32 %v208, %v230
    %v235 = vadd.f32 %v211, %v231
    %v236 = vadd.f32 %v216, %v232
    %v237 = vadd.f32 %v219, %v233
    %v238 = vmul.f32 %v234, 0.7978846
    %v239 = vmul.f32 %v235, 0.7978846
    %v240 = vmul.f32 %v236, 0.7978846
    %v241 = vmul.f32 %v237, 0.7978846
    %v242 = vtanh.pop %v238
    %v243 = vtanh.pop %v239
    %v244 = vtanh.pop %v240
    %v245 = vtanh.pop %v241
    %v246 = vadd.f32 %v242, 1.0
    %v247 = vadd.f32 %v243, 1.0
    %v248 = vadd.f32 %v244, 1.0
    %v249 = vadd.f32 %v245, 1.0
    %v250 = vmul.f32 %v246, 0.5
    %v251 = vmul.f32 %v247, 0.5
    %v252 = vmul.f32 %v248, 0.5
    %v253 = vmul.f32 %v249, 0.5
    %v254 = vmul.f32 %v208, %v250
    %v255 = vmul.f32 %v211, %v251
    %v256 = vmul.f32 %v216, %v252
    %v257 = vmul.f32 %v219, %v253
    %v258 = vpack.c.bf16 %v255, %v254
    %v259 = vpack.c.bf16 %v257, %v256
    %v260 = vld [vmem:[#allocation7] sm:$0xf]
    %v261 = vld [vmem:[#allocation7 + $0x4] sm:$0xf]
    %v262 = vld [vmem:[#allocation7 + $0x8] sm:$0xf]
    %v263 = vld [vmem:[#allocation7 + $0xc] sm:$0xf]
    %v264 = vld [vmem:[#allocation7 + $0x10] sm:$0xf]
    %v265 = vld [vmem:[#allocation7 + $0x14] sm:$0xf]
    %v266 = vld [vmem:[#allocation7 + $0x18] sm:$0xf]
    %v267 = vld [vmem:[#allocation7 + $0x1c] sm:$0xf]
    %v268 = vld [vmem:[#allocation7 + $0x20] sm:$0xf]
    %v269 = vld [vmem:[#allocation7 + $0x24] sm:$0xf]
    %v270 = vld [vmem:[#allocation7 + $0x28] sm:$0xf]
    %v271 = vld [vmem:[#allocation7 + $0x2c] sm:$0xf]
    %v272 = vld [vmem:[#allocation7 + $0x30] sm:$0xf]
    %v273 = vld [vmem:[#allocation7 + $0x34] sm:$0xf]
    %v274 = vld [vmem:[#allocation7 + $0x38] sm:$0xf]
    %v275 = vld [vmem:[#allocation7 + $0x3c] sm:$0xf]
    %v276 = vld [vmem:[%s4] sm:$0x1]
    %v278 = vlaneseq
    %v279 = vshrl.u32 %v278, 7
    %v280 = vsub.s32 0, %v279
    %v281 = vrot.slane %v276, %v280
    %v299 = vunpack.c.l.b16 %v260
    %v300 = vunpack.c.l.b16 %v261
    %v301 = vunpack.c.l.b16 %v262
    %v302 = vunpack.c.l.b16 %v263
    %v303 = vunpack.c.l.b16 %v264
    %v304 = vunpack.c.l.b16 %v265
    %v305 = vunpack.c.l.b16 %v266
    %v306 = vunpack.c.l.b16 %v267
    %v307 = vunpack.c.l.b16 %v268
    %v308 = vunpack.c.l.b16 %v269
    %v309 = vunpack.c.l.b16 %v270
    %v310 = vunpack.c.l.b16 %v271
    %v311 = vunpack.c.l.b16 %v272
    %v312 = vunpack.c.l.b16 %v273
    %v313 = vunpack.c.l.b16 %v274
    %v314 = vunpack.c.l.b16 %v275
    %v315 = vpack.c.b16 %v300, %v299
    %v316 = vpack.c.b16 %v302, %v301
    %v317 = vpack.c.b16 %v304, %v303
    %v318 = vpack.c.b16 %v306, %v305
    %v319 = vpack.c.b16 %v308, %v307
    %v320 = vpack.c.b16 %v310, %v309
    %v321 = vpack.c.b16 %v312, %v311
    %v322 = vpack.c.b16 %v314, %v313
    %331 = vmatprep.subr.bf16.mxu0 0
    %332 = vmatpush1.bf16.msra.mxu0 %v315
    %333 = vmatprep.subr.bf16.mxu0 0
    %334 = vmatpush1.bf16.msra.mxu0 %v316
    %335 = vmatprep.subr.bf16.mxu0 0
    %336 = vmatpush1.bf16.msra.mxu0 %v317
    %337 = vmatprep.subr.bf16.mxu0 0
    %338 = vmatpush1.bf16.msra.mxu0 %v318
    %339 = vmatprep.subr.bf16.mxu0 0
    %340 = vmatpush1.bf16.msra.mxu0 %v319
    %341 = vmatprep.subr.bf16.mxu0 0
    %342 = vmatpush1.bf16.msra.mxu0 %v320
    %343 = vmatprep.subr.bf16.mxu0 0
    %344 = vmatpush1.bf16.msra.mxu0 %v321
    %345 = vmatprep.subr.bf16.mxu0 0
    %346 = vmatpush1.bf16.msra.mxu0 %v322
    %347 = vmatprep.subr.bf16.mxu0 0
    %348 = vmatpush1.bf16.msra.mxu0 0
    %349 = vmatprep.subr.bf16.mxu0 0
    %350 = vmatpush1.bf16.msra.mxu0 0
    %351 = vmatprep.subr.bf16.mxu0 0
    %352 = vmatpush1.bf16.msra.mxu0 0
    %353 = vmatprep.subr.bf16.mxu0 0
    %354 = vmatpush1.bf16.msra.mxu0 0
    %355 = vmatprep.subr.bf16.mxu0 0
    %356 = vmatpush1.bf16.msra.mxu0 0
    %357 = vmatprep.subr.bf16.mxu0 0
    %358 = vmatpush1.bf16.msra.mxu0 0
    %359 = vmatprep.subr.bf16.mxu0 0
    %360 = vmatpush1.bf16.msra.mxu0 0
    %361 = vmatprep.subr.bf16.mxu0 0
    %362 = vmatpush1.bf16.msra.mxu0 0
    %363 = vmatprep.mubr.bf16.mxu0 0
    %364 = vmatmul.mubr.bf16.gmra.mrb[0].mxu0 %v258
    %v365 = vpop.f32.mrb[0].mxu0
    %v366 = vadd.f32 %v281, %v365
    %v367 = vpop.f32.mrb[0].mxu0
    %v368 = vpop.f32.mrb[0].mxu0
    %v369 = vadd.f32 %v281, %v368
    %v370 = vpop.f32.mrb[0].mxu0
    %371 = vmatprep.mubr.bf16.mxu0 0
    %372 = vmatmul.mubr.bf16.gmra.mrb[0].mxu0 %v259
    %v373 = vpop.f32.mrb[0].mxu0
    %v374 = vadd.f32 %v281, %v373
    %v375 = vpop.f32.mrb[0].mxu0
    %v376 = vpop.f32.mrb[0].mxu0
    %v377 = vadd.f32 %v281, %v376
    %v378 = vpop.f32.mrb[0].mxu0
    %379 = vdwg.mxu0
    %v380 = vmax.f32 %v366, 0.0
    %v381 = vmax.f32 %v369, 0.0
    %v382 = vmax.f32 %v374, 0.0
    %v383 = vmax.f32 %v377, 0.0
    %v384 = vld [vmem:[%s5] sm:$0x1]
    %v385 = vpack.c.bf16 %v381, %v380
    %v386 = vpack.c.bf16 %v383, %v382
    %vm387 = vcmask 261120
    %v389 = vsel %vm387, %v384, 0
    %391 = vmatprep.subr.bf16.mxu0 0
    %392 = vmatpush1.bf16.msra.mxu0 %v385
    %393 = vmatprep.subr.bf16.mxu0 0
    %394 = vmatpush1.bf16.msra.mxu0 %v386
    %395 = vmatprep.subr.bf16.mxu0 0
    %396 = vmatpush1.bf16.msra.mxu0 0
    %397 = vmatprep.subr.bf16.mxu0 0
    %398 = vmatpush1.bf16.msra.mxu0 0
    %399 = vmatprep.subr.bf16.mxu0 0
    %400 = vmatpush1.bf16.msra.mxu0 0
    %401 = vmatprep.subr.bf16.mxu0 0
    %402 = vmatpush1.bf16.msra.mxu0 0
    %403 = vmatprep.subr.bf16.mxu0 0
    %404 = vmatpush1.bf16.msra.mxu0 0
    %405 = vmatprep.subr.bf16.mxu0 0
    %406 = vmatpush1.bf16.msra.mxu0 0
    %407 = vmatprep.subr.bf16.mxu0 0
    %408 = vmatpush1.bf16.msra.mxu0 0
    %409 = vmatprep.subr.bf16.mxu0 0
    %410 = vmatpush1.bf16.msra.mxu0 0
    %411 = vmatprep.subr.bf16.mxu0 0
    %412 = vmatpush1.bf16.msra.mxu0 0
    %413 = vmatprep.subr.bf16.mxu0 0
    %414 = vmatpush1.bf16.msra.mxu0 0
    %415 = vmatprep.subr.bf16.mxu0 0
    %416 = vmatpush1.bf16.msra.mxu0 0
    %417 = vmatprep.subr.bf16.mxu0 0
    %418 = vmatpush1.bf16.msra.mxu0 0
    %419 = vmatprep.subr.bf16.mxu0 0
    %420 = vmatpush1.bf16.msra.mxu0 0
    %421 = vmatprep.subr.bf16.mxu0 0
    %422 = vmatpush1.bf16.msra.mxu0 0
    %423 = vmatprep.mubr.bf16.mxu0 0
    %424 = vmatmul.mubr.bf16.gmra.mrb[0].mxu0 %v389
    %v425 = vpop.f32.mrb[0].mxu0
    %v426 = vadd.f32 0.0, %v425
    %v427 = vpop.f32.mrb[0].mxu0
    %v428 = vpop.f32.mrb[0].mxu0
    %v429 = vpop.f32.mrb[0].mxu0
    %430 = vdwg.mxu0
    %v431 = vpack.c.bf16 %v426, %v426
    %v432 = vld [vmem:[#allocation8] sm:$0xf]
    %v433 = vld [vmem:[#allocation8 + $0x4] sm:$0xf]
    %v434 = vld [vmem:[#allocation8 + $0x8] sm:$0xf]
    %v435 = vld [vmem:[#allocation8 + $0xc] sm:$0xf]
    %v436 = vld [vmem:[#allocation8 + $0x10] sm:$0xf]
    %v437 = vld [vmem:[#allocation8 + $0x14] sm:$0xf]
    %v438 = vld [vmem:[#allocation8 + $0x18] sm:$0xf]
    %v439 = vld [vmem:[#allocation8 + $0x1c] sm:$0xf]
    %v440 = vld [vmem:[#allocation8 + $0x20] sm:$0xf]
    %v441 = vld [vmem:[#allocation8 + $0x24] sm:$0xf]
    %v442 = vld [vmem:[#allocation8 + $0x28] sm:$0xf]
    %v443 = vld [vmem:[#allocation8 + $0x2c] sm:$0xf]
    %v444 = vld [vmem:[#allocation8 + $0x30] sm:$0xf]
    %v445 = vld [vmem:[#allocation8 + $0x34] sm:$0xf]
    %v446 = vld [vmem:[#allocation8 + $0x38] sm:$0xf]
    %v447 = vld [vmem:[#allocation8 + $0x3c] sm:$0xf]
    %v448 = vld [vmem:[%s7] sm:$0x1]
    %v450 = vlaneseq
    %v451 = vshrl.u32 %v450, 7
    %v452 = vsub.s32 0, %v451
    %v453 = vrot.slane %v448, %v452
    %v471 = vunpack.c.l.b16 %v432
    %v472 = vunpack.c.l.b16 %v433
    %v473 = vunpack.c.l.b16 %v434
    %v474 = vunpack.c.l.b16 %v435
    %v475 = vunpack.c.l.b16 %v436
    %v476 = vunpack.c.l.b16 %v437
    %v477 = vunpack.c.l.b16 %v438
    %v478 = vunpack.c.l.b16 %v439
    %v479 = vunpack.c.l.b16 %v440
    %v480 = vunpack.c.l.b16 %v441
    %v481 = vunpack.c.l.b16 %v442
    %v482 = vunpack.c.l.b16 %v443
    %v483 = vunpack.c.l.b16 %v444
    %v484 = vunpack.c.l.b16 %v445
    %v485 = vunpack.c.l.b16 %v446
    %v486 = vunpack.c.l.b16 %v447
    %v487 = vpack.c.b16 %v472, %v471
    %v488 = vpack.c.b16 %v474, %v473
    %v489 = vpack.c.b16 %v476, %v475
    %v490 = vpack.c.b16 %v478, %v477
    %v491 = vpack.c.b16 %v480, %v479
    %v492 = vpack.c.b16 %v482, %v481
    %v493 = vpack.c.b16 %v484, %v483
    %v494 = vpack.c.b16 %v486, %v485
    %503 = vmatprep.subr.bf16.mxu0 0
    %504 = vmatpush1.bf16.msra.mxu0 %v487
    %505 = vmatprep.subr.bf16.mxu0 0
    %506 = vmatpush1.bf16.msra.mxu0 %v488
    %507 = vmatprep.subr.bf16.mxu0 0
    %508 = vmatpush1.bf16.msra.mxu0 %v489
    %509 = vmatprep.subr.bf16.mxu0 0
    %510 = vmatpush1.bf16.msra.mxu0 %v490
    %511 = vmatprep.subr.bf16.mxu0 0
    %512 = vmatpush1.bf16.msra.mxu0 %v491
    %513 = vmatprep.subr.bf16.mxu0 0
    %514 = vmatpush1.bf16.msra.mxu0 %v492
    %515 = vmatprep.subr.bf16.mxu0 0
    %516 = vmatpush1.bf16.msra.mxu0 %v493
    %517 = vmatprep.subr.bf16.mxu0 0
    %518 = vmatpush1.bf16.msra.mxu0 %v494
    %519 = vmatprep.subr.bf16.mxu0 0
    %520 = vmatpush1.bf16.msra.mxu0 0
    %521 = vmatprep.subr.bf16.mxu0 0
    %522 = vmatpush1.bf16.msra.mxu0 0
    %523 = vmatprep.subr.bf16.mxu0 0
    %524 = vmatpush1.bf16.msra.mxu0 0
    %525 = vmatprep.subr.bf16.mxu0 0
    %526 = vmatpush1.bf16.msra.mxu0 0
    %527 = vmatprep.subr.bf16.mxu0 0
    %528 = vmatpush1.bf16.msra.mxu0 0
    %529 = vmatprep.subr.bf16.mxu0 0
    %530 = vmatpush1.bf16.msra.mxu0 0
    %531 = vmatprep.subr.bf16.mxu0 0
    %532 = vmatpush1.bf16.msra.mxu0 0
    %533 = vmatprep.subr.bf16.mxu0 0
    %534 = vmatpush1.bf16.msra.mxu0 0
    %535 = vmatprep.mubr.bf16.mxu0 0
    %536 = vmatmul.mubr.bf16.gmra.mrb[0].mxu0 %v431
    %v537 = vpop.f32.mrb[0].mxu0
    %v538 = vadd.f32 %v453, %v537
    %v539 = vpop.f32.mrb[0].mxu0
    %v540 = vpop.f32.mrb[0].mxu0
    %v541 = vpop.f32.mrb[0].mxu0
    %542 = vdwg.mxu0
    %543 = vst [vmem:[#allocation10] sm:$0x3] %v538
    // Predicated region
    $region50: #{tpu_custom_call.1} parent=1 // pred_check
      _
    $region51: #{tpu_custom_call.1} parent=1 // pred_check_branch
      %545 = sbr.rel (0) target = $region53
    $region52: #{tpu_custom_call.1} parent=1 // pred_region
      %s547 = ssub.s32 32, 32
      %548 = vsyncadd [#allocation4], %s547
      %s550 = sshll.u32 [#allocation10], 4
      %s551 = int_to_ptr.vmem [resolvable:$true] %s550
      %553 = dma.vmem_to_hbm [thread:$0]  %s551, 32, %s8, [#allocation4]
    $region53: #{tpu_custom_call.1} parent=1 // pred_fallthru
      _
    // Predicated region
    $region54: #{tpu_custom_call.1} parent=1 // pred_check
      _
    $region55: #{tpu_custom_call.1} parent=1 // pred_check_branch
      %555 = sbr.rel (0) target = $region57
    $region56: #{tpu_custom_call.1} parent=1 // pred_region
      %556 = dma.done [#allocation4], 32
    $region57: #{tpu_custom_call.1} parent=1 // pred_fallthru
      _
    %557 = vsyncpa [#allocation3], 1
    %558 = vsyncpa [#allocation6], 1
    %559 = vsyncpa [#allocation9], 1
    %560 = vsyncpa [#allocation4], 1

</llo_original>
